<compile_context>
chip_gen: v7x
topology: tpu7x:2x2x1
jax: 0.10.0
libtpu: 0.0.40
codegen_flags: <defaults>
</compile_context>

<pallas_src>
import functools
import math

import jax
import jax.numpy as jnp
from jax.experimental import pallas as pl
from jax.experimental.pallas import tpu as pltpu


def _round_up(x, m):
    return ((x + m - 1) // m) * m


# --------------------------------------------------------------------------- #
# Chip-dependent tile targets (resolved once).
# --------------------------------------------------------------------------- #
@functools.lru_cache(maxsize=None)
def _select_targets():
    """Returns (tm_target, tn_target, tk_target, vmem_capacity_bytes)."""
    try:
        info = pltpu.get_tpu_info()
        vmem_cap = int(getattr(info, "vmem_capacity_bytes", 64 << 20))
    except Exception:  # conservative fallback (works on every generation)
        vmem_cap = 64 << 20
    if vmem_cap <= (96 << 20):
        # 64 MiB / TensorCore (v7x-class): ~440 flop/byte > ~310 needed,
        # double-buffered footprint ~20-24 MiB, well under the 48 MiB target.
        return 768, 1024, 2048, vmem_cap
    # 128 MiB VMEM (v5e / v6e): 2048x1024 output tile gives ~683 flop/byte
    # (clears the v6e ~680 roofline ratio; far above v5e's ~240 requirement).
    return 2048, 1024, 2048, vmem_cap


def _plan_dim(dim, target, align):
    """Pad `dim` to a multiple of `align`; choose the tile (<= target) so the
    tile divides the padded dim.  Returns (padded_dim, tile)."""
    padded = _round_up(max(dim, 1), align)
    tgt = _round_up(max(min(target, padded), align), align)
    if padded <= tgt:
        return padded, padded          # whole (hardware-min padded) dim, 1 block
    tile = tgt
    return _round_up(padded, tile), tile


def _pad2(a, rows, cols, dtype):
    """Cast + zero-pad a 2-D array; no-op when already the right shape/dtype."""
    r, c = a.shape
    if (r, c) == (rows, cols):
        return a if a.dtype == dtype else a.astype(dtype)
    return jnp.zeros((rows, cols), dtype).at[:r, :c].set(a.astype(dtype))


# --------------------------------------------------------------------------- #
# Kernels.
# --------------------------------------------------------------------------- #
def _fc_kernel_single(*refs, has_bias):
    """Single K step: full contraction per tile, write output directly."""
    if has_bias:
        x_ref, w_ref, b_ref, o_ref = refs
    else:
        x_ref, w_ref, o_ref = refs
        b_ref = None
    acc = jnp.dot(x_ref[...], w_ref[...], preferred_element_type=jnp.float32)
    if has_bias:
        acc = acc + b_ref[...].astype(jnp.float32)   # (1, TN) broadcasts
    o_ref[...] = acc.astype(o_ref.dtype)


def _fc_kernel_accout(*refs, has_bias):
    """Multi K step, f32 output: accumulate directly in o_ref (no scratch)."""
    if has_bias:
        x_ref, w_ref, b_ref, o_ref = refs
    else:
        x_ref, w_ref, o_ref = refs
        b_ref = None
    k = pl.program_id(2)

    @pl.when(k == 0)
    def _():
        o_ref[...] = jnp.zeros_like(o_ref)

    o_ref[...] += jnp.dot(x_ref[...], w_ref[...],
                          preferred_element_type=jnp.float32)

    if has_bias:
        @pl.when(k == pl.num_programs(2) - 1)
        def _():
            o_ref[...] += b_ref[...].astype(o_ref.dtype)


def _fc_kernel_scratch(*refs, has_bias):
    """Multi K step, non-f32 output: f32 VMEM scratch accumulator."""
    if has_bias:
        x_ref, w_ref, b_ref, o_ref, acc_ref = refs
    else:
        x_ref, w_ref, o_ref, acc_ref = refs
        b_ref = None
    k = pl.program_id(2)

    @pl.when(k == 0)
    def _():
        acc_ref[...] = jnp.zeros_like(acc_ref)

    acc_ref[...] += jnp.dot(x_ref[...], w_ref[...],
                            preferred_element_type=jnp.float32)

    @pl.when(k == pl.num_programs(2) - 1)
    def _():
        out = acc_ref[...]
        if has_bias:
            out = out + b_ref[...].astype(jnp.float32)
        o_ref[...] = out.astype(o_ref.dtype)


# --------------------------------------------------------------------------- #
# Core pallas_call wrapper (operates on a pre-padded weight / bias).
# --------------------------------------------------------------------------- #
def _fc_matmul(x2, wp, bp, *, M, N, K, Mp, TM, TN, TK,
               out_dtype, compute_dtype, vmem_cap):
    Kp, Np = wp.shape
    nk = Kp // TK
    mb = Mp // TM
    nb = Np // TN
    has_bias = bp is not None

    # Pad/cast x only when necessary (skip the extra HBM pass when aligned).
    if (M, K) != (Mp, Kp):
        xp = jnp.zeros((Mp, Kp), compute_dtype).at[:M, :K].set(
            x2.astype(compute_dtype))
    elif x2.dtype != compute_dtype:
        xp = x2.astype(compute_dtype)
    else:
        xp = x2

    # Grid ordering: put the axis with more blocks first so a 1-block parallel
    # axis never leaves a TensorCore idle on multi-TC chips.  K (if present)
    # is always the innermost / last ("arbitrary") axis.
    m_major = mb >= nb
    if nk == 1:
        if m_major:
            grid = (mb, nb)
            x_map = lambda i, j: (i, 0)
            w_map = lambda i, j: (0, j)
            b_map = lambda i, j: (0, j)
            o_map = lambda i, j: (i, j)
        else:
            grid = (nb, mb)
            x_map = lambda j, i: (i, 0)
            w_map = lambda j, i: (0, j)
            b_map = lambda j, i: (0, j)
            o_map = lambda j, i: (i, j)
        dims = ("parallel", "parallel")
    else:
        if m_major:
            grid = (mb, nb, nk)
            x_map = lambda i, j, k: (i, k)
            w_map = lambda i, j, k: (k, j)
            b_map = lambda i, j, k: (0, j)
            o_map = lambda i, j, k: (i, j)
        else:
            grid = (nb, mb, nk)
            x_map = lambda j, i, k: (i, k)
            w_map = lambda j, i, k: (k, j)
            b_map = lambda j, i, k: (0, j)
            o_map = lambda j, i, k: (i, j)
        dims = ("parallel", "parallel", "arbitrary")

    in_specs = [pl.BlockSpec((TM, TK), x_map),
                pl.BlockSpec((TK, TN), w_map)]
    operands = [xp, wp]
    if has_bias:
        in_specs.append(pl.BlockSpec((1, TN), b_map))
        operands.append(bp)

    is_f32_out = jnp.dtype(out_dtype) == jnp.dtype(jnp.float32)
    if nk == 1:
        kernel = functools.partial(_fc_kernel_single, has_bias=has_bias)
        scratch = []
    elif is_f32_out:
        kernel = functools.partial(_fc_kernel_accout, has_bias=has_bias)
        scratch = []
    else:
        kernel = functools.partial(_fc_kernel_scratch, has_bias=has_bias)
        scratch = [pltpu.VMEM((TM, TN), jnp.float32)]

    # Explicit scoped-VMEM limit sized from the actual tile footprint
    # (double-buffered inputs/outputs + scratch) plus headroom, clamped to a
    # safe fraction of physical VMEM.
    csize = jnp.dtype(compute_dtype).itemsize
    osize = jnp.dtype(out_dtype).itemsize
    need = (2 * TM * TK * csize + 2 * TK * TN * csize + 2 * TM * TN * osize
            + (TM * TN * 4 if scratch else 0)
            + (2 * TN * 4 if has_bias else 0))
    vmem_limit = int(max(32 << 20, min(need + (16 << 20),
                                       int(vmem_cap * 0.75))))

    out = pl.pallas_call(
        kernel,
        out_shape=jax.ShapeDtypeStruct((Mp, Np), out_dtype),
        grid_spec=pltpu.PrefetchScalarGridSpec(
            num_scalar_prefetch=0,
            grid=grid,
            in_specs=in_specs,
            out_specs=pl.BlockSpec((TM, TN), o_map),
            scratch_shapes=scratch,
        ),
        compiler_params=pltpu.CompilerParams(
            dimension_semantics=dims,
            vmem_limit_bytes=vmem_limit),
    )(*operands)

    if (Mp, Np) != (M, N):
        out = out[:M, :N]
    return out


# --------------------------------------------------------------------------- #
# Standalone functional wrapper: x (..., K) @ w_t (K, N) (+ b).
# --------------------------------------------------------------------------- #
def fc_forward(x, w_t, b=None, *, compute_dtype=jnp.bfloat16,
               max_tm=None, max_tn=None, max_tk=None):
    tm_t, tn_t, tk_t, vmem_cap = _select_targets()
    if max_tm is not None:
        tm_t = max_tm
    if max_tn is not None:
        tn_t = max_tn
    if max_tk is not None:
        tk_t = max_tk

    orig_shape = x.shape
    K = orig_shape[-1]
    N = w_t.shape[1]
    M = int(math.prod(orig_shape[:-1])) if len(orig_shape) > 1 else 1

    Kp, TK = _plan_dim(K, tk_t, 128)
    Np, TN = _plan_dim(N, tn_t, 128)
    Mp, TM = _plan_dim(M, tm_t, 16)      # 16: bf16 sublane packing

    wp = _pad2(w_t, Kp, Np, compute_dtype)
    bp = None if b is None else _pad2(jnp.asarray(b).reshape(1, -1),
                                      1, Np, jnp.float32)

    out2 = _fc_matmul(x.reshape(M, K), wp, bp, M=M, N=N, K=K,
                      Mp=Mp, TM=TM, TN=TN, TK=TK,
                      out_dtype=x.dtype, compute_dtype=compute_dtype,
                      vmem_cap=vmem_cap)
    return out2.reshape(orig_shape[:-1] + (N,))


# --------------------------------------------------------------------------- #
# Pure-JAX reference (same bf16 cast of operands, f32 accumulation).
# --------------------------------------------------------------------------- #
def _reference(x, w_t, b=None, compute_dtype=jnp.bfloat16):
    xd = x.astype(compute_dtype).astype(jnp.float32)
    wd = w_t.astype(compute_dtype).astype(jnp.float32)
    out = jnp.dot(xd.reshape(-1, xd.shape[-1]), wd,
                  precision=jax.lax.Precision.HIGHEST)
    if b is not None:
        out = out + b
    return out.reshape(x.shape[:-1] + (wd.shape[1],)).astype(x.dtype)


# --------------------------------------------------------------------------- #
# FC module (forward-only), mirroring the PyTorch semantics.
# --------------------------------------------------------------------------- #
class FCPallas:
    def __init__(self, input_channel, output_channel, BIAS, key,
                 compute_dtype=jnp.bfloat16):
        kw, kb = jax.random.split(key)
        bound = 1.0 / math.sqrt(input_channel)
        # nn.Linear default init: U(-1/sqrt(in), 1/sqrt(in)) for weight & bias.
        w = jax.random.uniform(kw, (output_channel, input_channel),
                               jnp.float32, -bound, bound)
        b = (jax.random.uniform(kb, (output_channel,), jnp.float32,
                                -bound, bound) if BIAS else None)

        self.K, self.N = input_channel, output_channel
        self.compute_dtype = compute_dtype
        self.w_t = jnp.transpose(w)          # (K, N) f32, kept for reference
        self.b = b

        # Chip-dependent tile plan for the (immutable) weight, resolved once.
        self.tm_t, self.tn_t, self.tk_t, self.vmem_cap = _select_targets()
        self.Kp, self.TK = _plan_dim(input_channel, self.tk_t, 128)
        self.Np, self.TN = _plan_dim(output_channel, self.tn_t, 128)

        # Hoisted: cast+pad the weight (bf16) and bias (f32) exactly once.
        self.wp = _pad2(self.w_t, self.Kp, self.Np, compute_dtype)
        self.bp = (None if b is None else
                   _pad2(b.reshape(1, -1), 1, self.Np, jnp.float32))

    def __call__(self, x):
        orig_shape = x.shape
        K = orig_shape[-1]
        M = int(math.prod(orig_shape[:-1])) if len(orig_shape) > 1 else 1
        Mp, TM = _plan_dim(M, self.tm_t, 16)
        out2 = _fc_matmul(x.reshape(M, K), self.wp, self.bp,
                          M=M, N=self.N, K=K, Mp=Mp, TM=TM,
                          TN=self.TN, TK=self.TK,
                          out_dtype=x.dtype, compute_dtype=self.compute_dtype,
                          vmem_cap=self.vmem_cap)
        return out2.reshape(orig_shape[:-1] + (self.N,))

    def reference(self, x):
        return _reference(x, self.w_t, self.b, self.compute_dtype)


# --------------------------------------------------------------------------- #
if __name__ == "__main__":
    key = jax.random.PRNGKey(0)
    kx1, kx2, kx3, km1, km2, km3, kb3 = jax.random.split(key, 7)

    # Case 1: small shapes, BIAS=True.  (2, 8, 32) -> (2, 8, 64).
    x1 = jax.random.normal(kx1, (2, 8, 32), jnp.float32)
    fc1 = FCPallas(32, 64, BIAS=True, key=km1)
    out1 = jax.block_until_ready(fc1(x1))
    assert out1.shape == (2, 8, 64)
    ref1 = fc1.reference(x1)
    assert jnp.allclose(out1, ref1, atol=2e-3, rtol=2e-3), \
        f"FC (bias) mismatch, max abs err {float(jnp.max(jnp.abs(out1 - ref1)))}"

    # Case 2: odd K/N padded only to hardware minima, BIAS=False.
    #   M = 400, K = 160 -> 256, N = 320 -> 384; single-K-step kernel path.
    x2 = jax.random.normal(kx2, (2, 200, 160), jnp.float32)
    fc2 = FCPallas(160, 320, BIAS=False, key=km2)
    out2 = jax.block_until_ready(fc2(x2))
    assert out2.shape == (2, 200, 320)
    ref2 = fc2.reference(x2)
    assert jnp.allclose(out2, ref2, atol=2e-3, rtol=2e-3), \
        f"FC (no bias) mismatch, max abs err {float(jnp.max(jnp.abs(out2 - ref2)))}"

    # Case 3: force small tiles to exercise the multi-block grid, the K
    # reduction path (accumulate-in-output) and the N-major grid ordering.
    x3 = jax.random.normal(kx3, (2, 24, 256), jnp.float32)
    w3 = jax.random.normal(km3, (384, 256), jnp.float32) * (1.0 / 16.0)
    b3 = jax.random.normal(kb3, (384,), jnp.float32) * 0.1
    out3 = jax.block_until_ready(
        fc_forward(x3, jnp.transpose(w3), b3, max_tm=64, max_tn=128, max_tk=128))
    assert out3.shape == (2, 24, 384)
    ref3 = _reference(x3, jnp.transpose(w3), b3)
    assert jnp.allclose(out3, ref3, atol=2e-3, rtol=2e-3), \
        f"FC (reduce) mismatch, max abs err {float(jnp.max(jnp.abs(out3 - ref3)))}"

    print("KERNEL_OK")
</pallas_src>

<mosaic_0001>
module attributes {stable_mosaic.version = 11 : i64} {
  func.func @_fc_kernel_single(%arg0: i32, %arg1: i32, %arg2: memref<16x128xbf16, #tpu.memory_space<vmem>>, %arg3: memref<128x128xbf16, #tpu.memory_space<vmem>>, %arg4: memref<1x128xf32, #tpu.memory_space<vmem>>, %arg5: memref<16x128xf32, #tpu.memory_space<vmem>>) attributes {dimension_semantics = [#tpu.dimension_semantics<parallel>, #tpu.dimension_semantics<parallel>], iteration_bounds = array<i64: 1, 1>, scalar_prefetch = 0 : i64, scratch_operands = 0 : i64, tpu.core_type = #tpu.core_type<tc>, window_params = [{transform_indices = @transform_0, window_bounds = array<i64: 16, 128>}, {transform_indices = @transform_1, window_bounds = array<i64: 128, 128>}, {transform_indices = @transform_2, window_bounds = array<i64: 1, 128>}, {transform_indices = @transform_3, window_bounds = array<i64: 16, 128>}]} {
    %c0 = arith.constant 0 : index
    %c0_0 = arith.constant 0 : index
    %0 = vector.load %arg2[%c0, %c0_0] : memref<16x128xbf16, #tpu.memory_space<vmem>>, vector<16x128xbf16>
    %c0_1 = arith.constant 0 : index
    %c0_2 = arith.constant 0 : index
    %1 = vector.load %arg3[%c0_1, %c0_2] : memref<128x128xbf16, #tpu.memory_space<vmem>>, vector<128x128xbf16>
    %cst = arith.constant dense<0.000000e+00> : vector<16x128xf32>
    %2 = tpu.matmul %0, %1, %cst {dimension_numbers = #tpu.dot_dimension_numbers<[1], [0], [0], [1], [0, 0, 1, 1], [], []>} : vector<16x128xbf16>, vector<128x128xbf16>, vector<16x128xf32> -> vector<16x128xf32>
    %c0_3 = arith.constant 0 : index
    %c0_4 = arith.constant 0 : index
    %3 = vector.load %arg4[%c0_3, %c0_4] : memref<1x128xf32, #tpu.memory_space<vmem>>, vector<1x128xf32>
    %4 = vector.broadcast %3 : vector<1x128xf32> to vector<16x128xf32>
    %5 = arith.addf %2, %4 : vector<16x128xf32>
    %c0_5 = arith.constant 0 : index
    %c0_6 = arith.constant 0 : index
    %6 = vector.load %arg5[%c0_5, %c0_6] : memref<16x128xf32, #tpu.memory_space<vmem>>, vector<16x128xf32>
    tpu.vector_store %arg5[%c0_5, %c0_6], %5 {strides = array<i32>} : memref<16x128xf32, #tpu.memory_space<vmem>>, vector<16x128xf32>,
    return
  }
  func.func @transform_0(%arg0: i32, %arg1: i32) -> (i32, i32) {
    %c0_i32 = arith.constant 0 : i32
    %c0_i32_0 = arith.constant 0 : i32
    return %arg0, %c0_i32 : i32, i32
  }
  func.func @transform_1(%arg0: i32, %arg1: i32) -> (i32, i32) {
    %c0_i32 = arith.constant 0 : i32
    %c0_i32_0 = arith.constant 0 : i32
    return %c0_i32, %arg1 : i32, i32
  }
  func.func @transform_2(%arg0: i32, %arg1: i32) -> (i32, i32) {
    %c0_i32 = arith.constant 0 : i32
    %c0_i32_0 = arith.constant 0 : i32
    return %c0_i32, %arg1 : i32, i32
  }
  func.func @transform_3(%arg0: i32, %arg1: i32) -> (i32, i32) {
    %c0_i32 = arith.constant 0 : i32
    return %arg0, %arg1 : i32, i32
  }
}

</mosaic_0001>

<llo_original>
// kernel: tpu_custom_call.1
$region0: #{tpu_custom_call.1}
  #allocation0 [shape = 'u32[]', space=smem, size = 0x4, offset = 0x4, fixed_abs, tag = 'smem constant byte address 0x4 - core index']
  #allocation1 [shape = 'u32[144,128]{1,0:T(1,128)}', space=vmem, size = 0x12000, scoped, tag = 'internal scratch']
  %s0 = inlined_call_operand.hbm [shape: bf16[16,128], index: 0, kind: input, shape index: {}]
  %s1 = inlined_call_operand.hbm [shape: bf16[128,128], index: 1, kind: input, shape index: {}]
  %s2 = inlined_call_operand.vmem [shape: f32[1,128], index: 2, kind: input, shape index: {}]
  %s3 = inlined_call_operand.hbm [shape: f32[16,128], index: 3, kind: output, shape index: {}]
  %s4 = sld [smem:[#allocation0]]
  $region30: #{tpu_custom_call.1} parent=0
    _
  %s6 = ssub.s32 1, %s4
  %s7 = scalar_select 0, %s6, %s4
  $region1: #{tpu_custom_call.1} parent=0
    #allocation2 [shape = 'u8[4096]{0}', space=vmem, size = 0x1000, scoped, tag = 'input window, operand 0, single buffered']
    #allocation3 [shape = 's32[1]{0}', space=sflag, size = 0x4, scoped, tag = 'scoped memory for tpu_custom_call.1']
    #allocation4 [shape = 's32[1]{0}', space=sflag, size = 0x4, scoped, tag = 'scoped memory for tpu_custom_call.1']
    #allocation5 [shape = 'u8[32768]{0}', space=vmem, size = 0x8000, scoped, tag = 'input window, operand 1, single buffered']
    #allocation6 [shape = 's32[1]{0}', space=sflag, size = 0x4, scoped, tag = 'scoped memory for tpu_custom_call.1']
    #allocation7 [shape = 'u8[8192]{0}', space=vmem, size = 0x2000, scoped, tag = 'output window, operand 0, single buffered']
    %8 = vsyncpa [#allocation3], 0
    %9 = vsyncpa [#allocation6], 0
    %10 = vsyncpa [#allocation4], 0
    // Predicated region
    $region2: #{tpu_custom_call.1} parent=1 // pred_check
      _
    $region3: #{tpu_custom_call.1} parent=1 // pred_check_branch
      %12 = sbr.rel (0) target = $region5
    $region4: #{tpu_custom_call.1} parent=1 // pred_region
      %s14 = ssub.s32 128, 128
      %15 = vsyncadd [#allocation3], %s14
      %s16 = sshll.u32 [#allocation2], 4
      %s17 = int_to_ptr.vmem [resolvable:$true] %s16
      %22 = dma.hbm_to_vmem [thread:$0]  %s0, 128, %s17, [#allocation3], 64, 64, 4
    $region5: #{tpu_custom_call.1} parent=1 // pred_fallthru
      _
    // Predicated region
    $region6: #{tpu_custom_call.1} parent=1 // pred_check
      _
    $region7: #{tpu_custom_call.1} parent=1 // pred_check_branch
      %24 = sbr.rel (0) target = $region9
    $region8: #{tpu_custom_call.1} parent=1 // pred_region
      %s26 = ssub.s32 1024, 1024
      %27 = vsyncadd [#allocation6], %s26
      %s28 = sshll.u32 [#allocation5], 4
      %s29 = int_to_ptr.vmem [resolvable:$true] %s28
      %34 = dma.hbm_to_vmem [thread:$0]  %s1, 1024, %s29, [#allocation6], 64, 64, 4
    $region9: #{tpu_custom_call.1} parent=1 // pred_fallthru
      _
    // Predicated region
    $region10: #{tpu_custom_call.1} parent=1 // pred_check
      _
    $region11: #{tpu_custom_call.1} parent=1 // pred_check_branch
      %36 = sbr.rel (0) target = $region13
    $region12: #{tpu_custom_call.1} parent=1 // pred_region
      _
    $region13: #{tpu_custom_call.1} parent=1 // pred_fallthru
      _
    // Predicated region
    $region14: #{tpu_custom_call.1} parent=1 // pred_check
      _
    $region15: #{tpu_custom_call.1} parent=1 // pred_check_branch
      %38 = sbr.rel (0) target = $region17
    $region16: #{tpu_custom_call.1} parent=1 // pred_region
      %39 = dma.done [#allocation3], 128
    $region17: #{tpu_custom_call.1} parent=1 // pred_fallthru
      _
    // Predicated region
    $region18: #{tpu_custom_call.1} parent=1 // pred_check
      _
    $region19: #{tpu_custom_call.1} parent=1 // pred_check_branch
      %41 = sbr.rel (0) target = $region21
    $region20: #{tpu_custom_call.1} parent=1 // pred_region
      %42 = dma.done [#allocation6], 1024
    $region21: #{tpu_custom_call.1} parent=1 // pred_fallthru
      _
    %v44 = vld [vmem:[#allocation2] sm:$0xf]
    %v45 = vld [vmem:[#allocation2 + $0x4] sm:$0xf]
    %v46 = vld [vmem:[#allocation5] sm:$0xf]
    %v47 = vld [vmem:[#allocation5 + $0x4] sm:$0xf]
    %v48 = vld [vmem:[#allocation5 + $0x8] sm:$0xf]
    %v49 = vld [vmem:[#allocation5 + $0xc] sm:$0xf]
    %v50 = vld [vmem:[#allocation5 + $0x10] sm:$0xf]
    %v51 = vld [vmem:[#allocation5 + $0x14] sm:$0xf]
    %v52 = vld [vmem:[#allocation5 + $0x18] sm:$0xf]
    %v53 = vld [vmem:[#allocation5 + $0x1c] sm:$0xf]
    %v54 = vld [vmem:[#allocation5 + $0x20] sm:$0xf]
    %v55 = vld [vmem:[#allocation5 + $0x24] sm:$0xf]
    %v56 = vld [vmem:[#allocation5 + $0x28] sm:$0xf]
    %v57 = vld [vmem:[#allocation5 + $0x2c] sm:$0xf]
    %v58 = vld [vmem:[#allocation5 + $0x30] sm:$0xf]
    %v59 = vld [vmem:[#allocation5 + $0x34] sm:$0xf]
    %v60 = vld [vmem:[#allocation5 + $0x38] sm:$0xf]
    %v61 = vld [vmem:[#allocation5 + $0x3c] sm:$0xf]
    %v62 = vld [vmem:[%s2] sm:$0x1]
    %v64 = vlaneseq
    %v65 = vshrl.u32 %v64, 7
    %v66 = vsub.s32 0, %v65
    %v67 = vrot.slane %v62, %v66
    %v71 = vunpack.c.l.b16 %v44
    %v72 = vunpack.c.l.b16 %v45
    %v73 = vpack.c.b16 %v72, %v71
    %v91 = vunpack.c.l.b16 %v46
    %v92 = vunpack.c.l.b16 %v47
    %v93 = vunpack.c.l.b16 %v48
    %v94 = vunpack.c.l.b16 %v49
    %v95 = vunpack.c.l.b16 %v50
    %v96 = vunpack.c.l.b16 %v51
    %v97 = vunpack.c.l.b16 %v52
    %v98 = vunpack.c.l.b16 %v53
    %v99 = vunpack.c.l.b16 %v54
    %v100 = vunpack.c.l.b16 %v55
    %v101 = vunpack.c.l.b16 %v56
    %v102 = vunpack.c.l.b16 %v57
    %v103 = vunpack.c.l.b16 %v58
    %v104 = vunpack.c.l.b16 %v59
    %v105 = vunpack.c.l.b16 %v60
    %v106 = vunpack.c.l.b16 %v61
    %v107 = vpack.c.b16 %v92, %v91
    %v108 = vpack.c.b16 %v94, %v93
    %v109 = vpack.c.b16 %v96, %v95
    %v110 = vpack.c.b16 %v98, %v97
    %v111 = vpack.c.b16 %v100, %v99
    %v112 = vpack.c.b16 %v102, %v101
    %v113 = vpack.c.b16 %v104, %v103
    %v114 = vpack.c.b16 %v106, %v105
    %123 = vmatprep.subr.bf16.mxu0 0
    %124 = vmatpush1.bf16.msra.mxu0 %v107
    %125 = vmatprep.subr.bf16.mxu0 0
    %126 = vmatpush1.bf16.msra.mxu0 %v108
    %127 = vmatprep.subr.bf16.mxu0 0
    %128 = vmatpush1.bf16.msra.mxu0 %v109
    %129 = vmatprep.subr.bf16.mxu0 0
    %130 = vmatpush1.bf16.msra.mxu0 %v110
    %131 = vmatprep.subr.bf16.mxu0 0
    %132 = vmatpush1.bf16.msra.mxu0 %v111
    %133 = vmatprep.subr.bf16.mxu0 0
    %134 = vmatpush1.bf16.msra.mxu0 %v112
    %135 = vmatprep.subr.bf16.mxu0 0
    %136 = vmatpush1.bf16.msra.mxu0 %v113
    %137 = vmatprep.subr.bf16.mxu0 0
    %138 = vmatpush1.bf16.msra.mxu0 %v114
    %139 = vmatprep.subr.bf16.mxu0 0
    %140 = vmatpush1.bf16.msra.mxu0 0
    %141 = vmatprep.subr.bf16.mxu0 0
    %142 = vmatpush1.bf16.msra.mxu0 0
    %143 = vmatprep.subr.bf16.mxu0 0
    %144 = vmatpush1.bf16.msra.mxu0 0
    %145 = vmatprep.subr.bf16.mxu0 0
    %146 = vmatpush1.bf16.msra.mxu0 0
    %147 = vmatprep.subr.bf16.mxu0 0
    %148 = vmatpush1.bf16.msra.mxu0 0
    %149 = vmatprep.subr.bf16.mxu0 0
    %150 = vmatpush1.bf16.msra.mxu0 0
    %151 = vmatprep.subr.bf16.mxu0 0
    %152 = vmatpush1.bf16.msra.mxu0 0
    %153 = vmatprep.subr.bf16.mxu0 0
    %154 = vmatpush1.bf16.msra.mxu0 0
    %155 = vmatprep.mubr.bf16.mxu0 0
    %156 = vmatmul.mubr.bf16.gmra.mrb[0].mxu0 %v73
    %v157 = vpop.f32.mrb[0].mxu0
    %v158 = vadd.f32 %v67, %v157
    %v159 = vpop.f32.mrb[0].mxu0
    %v160 = vpop.f32.mrb[0].mxu0
    %v161 = vadd.f32 %v67, %v160
    %v162 = vpop.f32.mrb[0].mxu0
    %163 = vdwg.mxu0
    %164 = vst [vmem:[#allocation7] sm:$0xff] %v158
    %165 = vst [vmem:[#allocation7 + $0x8] sm:$0xff] %v161
    // Predicated region
    $region22: #{tpu_custom_call.1} parent=1 // pred_check
      _
    $region23: #{tpu_custom_call.1} parent=1 // pred_check_branch
      %167 = sbr.rel (0) target = $region25
    $region24: #{tpu_custom_call.1} parent=1 // pred_region
      %s169 = ssub.s32 256, 256
      %170 = vsyncadd [#allocation4], %s169
      %s171 = sshll.u32 [#allocation7], 4
      %s172 = int_to_ptr.vmem [resolvable:$true] %s171
      %177 = dma.vmem_to_hbm [thread:$0]  %s172, 256, %s3, [#allocation4], 128, 128, 8
    $region25: #{tpu_custom_call.1} parent=1 // pred_fallthru
      _
    // Predicated region
    $region26: #{tpu_custom_call.1} parent=1 // pred_check
      _
    $region27: #{tpu_custom_call.1} parent=1 // pred_check_branch
      %179 = sbr.rel (0) target = $region29
    $region28: #{tpu_custom_call.1} parent=1 // pred_region
      %180 = dma.done [#allocation4], 256
    $region29: #{tpu_custom_call.1} parent=1 // pred_fallthru
      _
    %181 = vsyncpa [#allocation3], 1
    %182 = vsyncpa [#allocation6], 1
    %183 = vsyncpa [#allocation4], 1

</llo_original>
